<compile_context>
chip_gen: v5e
topology: v5e:2x2
jax: 0.10.0
libtpu: 0.0.40
codegen_flags: <defaults>
</compile_context>

<pallas_src>
import functools
import math

import jax
import jax.numpy as jnp
import numpy as np
from jax.experimental import pallas as pl
from jax.experimental.pallas import tpu as pltpu


def _round_up(n, m):
    return ((n + m - 1) // m) * m


def _cdiv(a, b):
    return -(-a // b)


# ----------------------------------------------------------------------------
# Cached constants (built once per (S, Kp) / (block_b, H)).
# ----------------------------------------------------------------------------
@functools.lru_cache(maxsize=16)
def _dft_constants(S: int, Kp: int, dft_dtype_name: str = "bfloat16"):
    """Real-DFT matrices for ortho rfft/irfft, zero-padded K -> Kp.

    Forward (2, Kp, S): [cos; -sin]/sqrt(S)  ->  xr = F[0]@x, xi = F[1]@x
    Inverse (2, S, Kp): [c*cos^T; -c*sin^T]/sqrt(S), with the conjugate-symmetry
    multiplicity c folded in.  DC/Nyquist imaginary parts drop out naturally
    (sin(0)=0, sin(pi*s)=0), matching torch.fft.irfft.
    """
    K = S // 2 + 1
    n = np.arange(S, dtype=np.int64)
    k = np.arange(K, dtype=np.int64)
    # Reduce k*n mod S in integers before forming the angle (precision at large S).
    ang = (2.0 * np.pi / S) * ((k[:, None] * n[None, :]) % S).astype(np.float64)
    scale = 1.0 / math.sqrt(S)
    cos_m = np.cos(ang) * scale                     # (K, S)
    sin_m = np.sin(ang) * scale                     # (K, S)

    fwd = np.zeros((2, Kp, S), dtype=np.float64)
    fwd[0, :K] = cos_m
    fwd[1, :K] = -sin_m

    c = np.full((K,), 2.0, dtype=np.float64)
    c[0] = 1.0
    if S % 2 == 0:
        c[K - 1] = 1.0
    inv = np.zeros((2, S, Kp), dtype=np.float64)
    inv[0, :, :K] = cos_m.T * c[None, :]
    inv[1, :, :K] = -(sin_m.T * c[None, :])

    dt = jnp.dtype(dft_dtype_name)
    # TODO(synk): for very long sequences (S >= ~2048) where bf16 DFT rounding
    # (~sqrt(S)*2^-9) matters, pass dft_dtype_name="float32" (2x VMEM/DMA) or
    # use a bf16 hi/lo split.
    return jnp.asarray(fwd, dtype=dt), jnp.asarray(inv, dtype=dt)


@functools.lru_cache(maxsize=16)
def _segment_matrix(block_b: int, H: int):
    """(NB, NB) block-diagonal ones: (h @ Mseg) gives, at every lane, the sum
    over that lane's H-wide hidden segment (per-(s, b) sums, already broadcast
    back across the segment)."""
    NB = block_b * H
    i = np.arange(NB)
    m = (i[:, None] // H == i[None, :] // H).astype(np.float32)
    return jnp.asarray(m)


# ----------------------------------------------------------------------------
# Generation-aware planning.
# ----------------------------------------------------------------------------
def _tpu_kind():
    try:
        return jax.devices()[0].device_kind.lower()
    except Exception:
        return ""


def plan_filter_layer(B: int, S: int, H: int):
    """Static tiling / VMEM-budget plan."""
    kind = _tpu_kind()
    is_v7 = "v7" in kind
    two_tc = is_v7 or "v4" in kind          # chips where 'parallel' sharding across TCs helps
    # Usable scoped-VMEM ceiling: ~100 MiB of the 128 MiB on v5e/v6e, ~48 MiB
    # of the 64 MiB on v7x.
    phys_cap = (48 << 20) if is_v7 else (100 << 20)

    K = S // 2 + 1

    # --- batch fold (block_b batches per grid step; lanes = block_b*H) -------
    # Mosaic block rule: the lane dim of a block must be a multiple of 128 or
    # equal the full array dim, so block_b == B or (block_b*H) % 128 == 0.
    x_block_cap = (4 << 20) if is_v7 else (12 << 20)
    lane_target = 256                        # >= 2 MXU column tiles
    candidates = [d for d in range(1, B + 1)
                  if B % d == 0 and (d == B or (d * H) % 128 == 0)]
    good = [d for d in candidates
            if d * H * S * 4 <= x_block_cap
            and (not two_tc or B // d >= min(2, B))]   # grid>=2 only on 2-TC chips
    if not good:
        good = [min(candidates)]
    block_b = None
    for d in sorted(good):
        if d * H >= lane_target:
            block_b = d
            break
    if block_b is None:
        block_b = max(good)
    NB = block_b * H

    # --- frequency chunking (streams F/G so they never must fit VMEM) --------
    # Fixed per-step residents: x & out blocks (double-buffered), accumulator,
    # and a handful of (S, NB) f32 body temporaries.
    fixed = 9 * S * NB * 4 + NB * NB * 4 + (4 << 20)
    # Per frequency row: F/G chunk rows (bf16, x2 buffers) + wr/wi chunk rows
    # (f32, x2 buffers) + (tk, NB) body temporaries.
    per_row = 16 * S + 32 * NB
    budget = max(phys_cap - fixed, 4 << 20)
    tk_max = max(8, budget // per_row)
    big_mxu = "v5" not in kind               # v6e/v7x: 256x256 MXU
    if tk_max >= K:
        align = 128 if (big_mxu and K >= 128) else (64 if K >= 64 else 8)
        tk = _round_up(K, align)
        nk = 1
    else:
        # When chunking, the G chunk's lane dim is tk -> must be a multiple of 128.
        tk = max(128, (int(tk_max) // 128) * 128)
        nk = _cdiv(K, tk)
    Kp = tk * nk

    # --- VMEM budget: const*1 + io*2 + per-step intermediates ----------------
    vmem_est = (
        2 * S * NB * 4                      # x block (x2 buffers, VMEM-resident over k)
        + 2 * S * NB * 4                    # out block (x2 buffers)
        + 1 * S * NB * 4                    # accumulator scratch
        + 4 * S * NB * 4                    # h / d / contrib / normed temporaries
        + 2 * (2 * tk * S * 2)              # F chunk (bf16, x2 buffers)
        + 2 * (2 * S * tk * 2)              # G chunk (bf16, x2 buffers)
        + 2 * 2 * (tk * NB * 4)             # wr / wi chunks (x2 buffers)
        + 4 * tk * NB * 4                   # xr / xi / yr / yi temporaries
        + NB * NB * 4 + 2 * NB * 4          # segment matrix, gamma, beta
    )
    vmem_limit = int(min(max(int(vmem_est * 1.15) + (2 << 20), 16 << 20), phys_cap))

    return dict(B=B, S=S, H=H, K=K, Kp=Kp, tk=tk, nk=nk,
                block_b=block_b, NB=NB, vmem_limit=vmem_limit)


# ----------------------------------------------------------------------------
# One-time parameter preparation (hoisted out of the per-call hot path).
# ----------------------------------------------------------------------------
def prepare_filter_layer_params(complex_weight, gamma, beta, plan):
    S, H, K, Kp = plan["S"], plan["H"], plan["K"], plan["Kp"]
    block_b = plan["block_b"]

    f_mat, g_mat = _dft_constants(S, Kp)

    wr = jnp.zeros((Kp, H), jnp.float32).at[:K].set(
        complex_weight[0, :, :, 0].astype(jnp.float32))
    wi = jnp.zeros((Kp, H), jnp.float32).at[:K].set(
        complex_weight[0, :, :, 1].astype(jnp.float32))
    # Lanes are (b, h) with b outer -> tile the H-wide params block_b times.
    wr_t = jnp.tile(wr, (1, block_b))                      # (Kp, NB)
    wi_t = jnp.tile(wi, (1, block_b))
    gamma_t = jnp.tile(gamma.reshape(1, H).astype(jnp.float32), (1, block_b))
    beta_t = jnp.tile(beta.reshape(1, H).astype(jnp.float32), (1, block_b))
    mseg = _segment_matrix(block_b, H)                     # (NB, NB) f32

    return dict(f=f_mat, g=g_mat, wr=wr_t, wi=wi_t,
                mseg=mseg, gamma=gamma_t, beta=beta_t)


# ----------------------------------------------------------------------------
# Kernel.
# ----------------------------------------------------------------------------
def _filter_layer_kernel(x_ref, f_ref, g_ref, wr_ref, wi_ref, mseg_ref,
                         gamma_ref, beta_ref, o_ref, acc_ref, *, eps, inv_h):
    k = pl.program_id(1)

    x = x_ref[...]                                         # (S, NB) f32, resident over k
    xb = x.astype(jnp.bfloat16)

    # rfft chunk: (tk, S) @ (S, NB) on the MXU, bf16 operands, f32 accumulate.
    xr = jnp.dot(f_ref[0], xb, preferred_element_type=jnp.float32)    # (tk, NB)
    xi = jnp.dot(f_ref[1], xb, preferred_element_type=jnp.float32)

    # Complex filter multiply (f32 on the VPU).
    wr = wr_ref[...]
    wi = wi_ref[...]
    yr = (xr * wr - xi * wi).astype(jnp.bfloat16)
    yi = (xr * wi + xi * wr).astype(jnp.bfloat16)

    # irfft chunk as two dots (no concatenate): (S, tk) @ (tk, NB).
    contrib = (jnp.dot(g_ref[0], yr, preferred_element_type=jnp.float32)
               + jnp.dot(g_ref[1], yi, preferred_element_type=jnp.float32))

    @pl.when(k == 0)
    def _():
        acc_ref[...] = contrib

    @pl.when(k > 0)
    def _():
        acc_ref[...] = acc_ref[...] + contrib

    # Finalize on the last frequency chunk: residual + LayerNorm + affine.
    @pl.when(k == pl.num_programs(1) - 1)
    def _():
        # TODO(synk): nn.Dropout omitted (identity — inference semantics).
        h = acc_ref[...] + x                               # (S, NB) f32
        mseg = mseg_ref[...]                               # (NB, NB) block-diag ones
        # Per-(s, b) mean/variance over the H hidden lanes via one matmul each:
        # the reduction rides the MXU and the result is already broadcast back
        # across each segment.  Centered two-pass (no E[h^2]-mean^2 cancellation).
        mean = jnp.dot(h, mseg, preferred_element_type=jnp.float32) * inv_h
        d = h - mean
        var = jnp.dot(d * d, mseg, preferred_element_type=jnp.float32) * inv_h
        normed = d * jax.lax.rsqrt(var + eps)
        o_ref[...] = (gamma_ref[...] * normed + beta_ref[...]).astype(o_ref.dtype)


# ----------------------------------------------------------------------------
# Hot path.
# ----------------------------------------------------------------------------
def filter_layer_apply(x, params, plan, *, eps=1e-12):
    """(B, S, H) -> (B, S, H).  Call under jax.jit."""
    B, S, H = x.shape
    NB, block_b = plan["NB"], plan["block_b"]
    tk, nk, Kp = plan["tk"], plan["nk"], plan["Kp"]
    nb = B // block_b
    grid = (nb, nk)

    # Lane-fold the batch: (B, S, H) -> (S, B*H).  Layout plumbing so both the
    # matmul N dim and the output store are lane-dense (block_b*H wide).
    x2 = jnp.transpose(x, (1, 0, 2)).reshape(S, B * H)

    itemsize_fg = jnp.dtype(params["f"].dtype).itemsize
    flops = int(8 * Kp * S * B * H + 4 * S * NB * B * H)
    bytes_accessed = int(2 * B * S * H * 4                       # x in + out
                         + nb * 2 * (2 * Kp * S) * itemsize_fg   # F + G streamed per batch block
                         + nb * 2 * Kp * NB * 4                  # wr + wi
                         + NB * NB * 4)
    cost = pl.CostEstimate(flops=flops, transcendentals=int(B * S * H),
                           bytes_accessed=bytes_accessed)

    kernel = functools.partial(_filter_layer_kernel, eps=eps, inv_h=1.0 / H)

    out2 = pl.pallas_call(
        kernel,
        out_shape=jax.ShapeDtypeStruct((S, B * H), x.dtype),
        grid_spec=pltpu.PrefetchScalarGridSpec(
            num_scalar_prefetch=0,
            grid=grid,
            in_specs=[
                # x slab: revisits block (0, i) across k -> fetched once per
                # batch block and kept VMEM-resident for the whole reduction.
                pl.BlockSpec((S, NB), lambda i, k: (0, i)),
                # Streamed DFT chunks (double-buffered by the pipeline).
                pl.BlockSpec((2, tk, S), lambda i, k: (0, k, 0)),   # F = [cos; -sin]
                pl.BlockSpec((2, S, tk), lambda i, k: (0, 0, k)),   # G = [c*cos^T; -c*sin^T]
                pl.BlockSpec((tk, NB), lambda i, k: (k, 0)),        # W real (lane-tiled)
                pl.BlockSpec((tk, NB), lambda i, k: (k, 0)),        # W imag (lane-tiled)
                # Small constants: revisit block (0,0) -> DMA'd only once.
                pl.BlockSpec((NB, NB), lambda i, k: (0, 0)),        # segment matrix
                pl.BlockSpec((1, NB), lambda i, k: (0, 0)),         # gamma
                pl.BlockSpec((1, NB), lambda i, k: (0, 0)),         # beta
            ],
            out_specs=pl.BlockSpec((S, NB), lambda i, k: (0, i)),
            scratch_shapes=[pltpu.VMEM((S, NB), jnp.float32)],      # irfft accumulator
        ),
        compiler_params=pltpu.CompilerParams(
            dimension_semantics=("parallel", "arbitrary"),
            vmem_limit_bytes=plan["vmem_limit"]),
        cost_estimate=cost,
    )(x2, params["f"], params["g"], params["wr"], params["wi"],
      params["mseg"], params["gamma"], params["beta"])

    # Un-fold back to (B, S, H).
    return out2.reshape(S, B, H).transpose(1, 0, 2)


def filter_layer(x, complex_weight, gamma, beta, *, eps=1e-12):
    """Convenience one-shot wrapper (plans + prepares params per call)."""
    B, S, H = x.shape
    plan = plan_filter_layer(B, S, H)
    params = prepare_filter_layer_params(complex_weight, gamma, beta, plan)
    return filter_layer_apply(x, params, plan, eps=eps)


# ----------------------------------------------------------------------------
# Pure-JAX reference mirroring the PyTorch forward.
# ----------------------------------------------------------------------------
def filter_layer_ref(x, complex_weight, gamma, beta, eps=1e-12):
    B, S, H = x.shape
    xf = jnp.fft.rfft(x, axis=1, norm="ortho")
    w = complex_weight[..., 0] + 1j * complex_weight[..., 1]   # (1, K, H)
    xf = xf * w
    y = jnp.fft.irfft(xf, n=S, axis=1, norm="ortho")
    h = y + x
    u = jnp.mean(h, axis=-1, keepdims=True)
    s = jnp.mean((h - u) ** 2, axis=-1, keepdims=True)
    normed = (h - u) / jnp.sqrt(s + eps)
    return gamma * normed + beta


if __name__ == "__main__":
    # Small shapes consistent with the module: batch=2, max_seq_length=8, hidden=32.
    B, S, H = 2, 8, 32
    K = S // 2 + 1

    key = jax.random.PRNGKey(0)
    kx, kw = jax.random.split(key)
    x = jax.random.normal(kx, (B, S, H), dtype=jnp.float32)
    # complex_weight ~ randn(1, S//2+1, H, 2) * 0.02
    complex_weight = jax.random.normal(kw, (1, K, H, 2), dtype=jnp.float32) * 0.02
    gamma = jnp.ones((H,), dtype=jnp.float32)    # LayerNorm.weight init
    beta = jnp.zeros((H,), dtype=jnp.float32)    # LayerNorm.bias init

    # Plan + prepare once (parameter padding/tiling hoisted out of the hot
    # path), then run the jitted hot path.
    plan = plan_filter_layer(B, S, H)
    params = prepare_filter_layer_params(complex_weight, gamma, beta, plan)
    apply_fn = jax.jit(lambda xx, pp: filter_layer_apply(xx, pp, plan))

    out = jax.block_until_ready(apply_fn(x, params))

    ref = filter_layer_ref(x, complex_weight, gamma, beta)
    assert out.shape == (B, S, H)
    err = float(jnp.max(jnp.abs(out - ref)))
    # bf16 MXU operands with f32 accumulation -> modest tolerance.
    assert jnp.allclose(out, ref, atol=5e-3, rtol=5e-3), err

    print("KERNEL_OK")
</pallas_src>

<mosaic_0001>
module attributes {stable_mosaic.version = 11 : i64} {
  func.func @_filter_layer_kernel(%arg0: i32, %arg1: i32, %arg2: memref<8x64xf32, #tpu.memory_space<vmem>>, %arg3: memref<2x8x8xbf16, #tpu.memory_space<vmem>>, %arg4: memref<2x8x8xbf16, #tpu.memory_space<vmem>>, %arg5: memref<8x64xf32, #tpu.memory_space<vmem>>, %arg6: memref<8x64xf32, #tpu.memory_space<vmem>>, %arg7: memref<64x64xf32, #tpu.memory_space<vmem>>, %arg8: memref<1x64xf32, #tpu.memory_space<vmem>>, %arg9: memref<1x64xf32, #tpu.memory_space<vmem>>, %arg10: memref<8x64xf32, #tpu.memory_space<vmem>>, %arg11: memref<8x64xf32, #tpu.memory_space<vmem>>) attributes {dimension_semantics = [#tpu.dimension_semantics<parallel>, #tpu.dimension_semantics<arbitrary>], iteration_bounds = array<i64: 1, 1>, scalar_prefetch = 0 : i64, scratch_operands = 1 : i64, tpu.core_type = #tpu.core_type<tc>, window_params = [{transform_indices = @transform_0, window_bounds = array<i64: 8, 64>}, {transform_indices = @transform_1, window_bounds = array<i64: 2, 8, 8>}, {transform_indices = @transform_2, window_bounds = array<i64: 2, 8, 8>}, {transform_indices = @transform_3, window_bounds = array<i64: 8, 64>}, {transform_indices = @transform_4, window_bounds = array<i64: 8, 64>}, {pipeline_mode = #tpu.pipeline_mode<synchronous>, transform_indices = @transform_5, window_bounds = array<i64: 64, 64>}, {pipeline_mode = #tpu.pipeline_mode<synchronous>, transform_indices = @transform_6, window_bounds = array<i64: 1, 64>}, {pipeline_mode = #tpu.pipeline_mode<synchronous>, transform_indices = @transform_7, window_bounds = array<i64: 1, 64>}, {transform_indices = @transform_8, window_bounds = array<i64: 8, 64>}]} {
    %c0 = arith.constant 0 : index
    %c0_0 = arith.constant 0 : index
    %0 = vector.load %arg2[%c0, %c0_0] : memref<8x64xf32, #tpu.memory_space<vmem>>, vector<8x64xf32>
    %1 = arith.truncf %0 : vector<8x64xf32> to vector<8x64xbf16>
    %c0_1 = arith.constant 0 : index
    %c0_2 = arith.constant 0 : index
    %c0_3 = arith.constant 0 : index
    %2 = vector.load %arg3[%c0_1, %c0_2, %c0_3] : memref<2x8x8xbf16, #tpu.memory_space<vmem>>, vector<1x8x8xbf16>
    %3 = vector.shape_cast %2 : vector<1x8x8xbf16> to vector<8x8xbf16>
    %cst = arith.constant dense<0.000000e+00> : vector<8x64xf32>
    %4 = tpu.matmul %3, %1, %cst {dimension_numbers = #tpu.dot_dimension_numbers<[1], [0], [0], [1], [0, 0, 1, 1], [], []>} : vector<8x8xbf16>, vector<8x64xbf16>, vector<8x64xf32> -> vector<8x64xf32>
    %c1 = arith.constant 1 : index
    %c0_4 = arith.constant 0 : index
    %c0_5 = arith.constant 0 : index
    %5 = vector.load %arg3[%c1, %c0_4, %c0_5] : memref<2x8x8xbf16, #tpu.memory_space<vmem>>, vector<1x8x8xbf16>
    %6 = vector.shape_cast %5 : vector<1x8x8xbf16> to vector<8x8xbf16>
    %cst_6 = arith.constant dense<0.000000e+00> : vector<8x64xf32>
    %7 = tpu.matmul %6, %1, %cst_6 {dimension_numbers = #tpu.dot_dimension_numbers<[1], [0], [0], [1], [0, 0, 1, 1], [], []>} : vector<8x8xbf16>, vector<8x64xbf16>, vector<8x64xf32> -> vector<8x64xf32>
    %c0_7 = arith.constant 0 : index
    %c0_8 = arith.constant 0 : index
    %8 = vector.load %arg5[%c0_7, %c0_8] : memref<8x64xf32, #tpu.memory_space<vmem>>, vector<8x64xf32>
    %c0_9 = arith.constant 0 : index
    %c0_10 = arith.constant 0 : index
    %9 = vector.load %arg6[%c0_9, %c0_10] : memref<8x64xf32, #tpu.memory_space<vmem>>, vector<8x64xf32>
    %10 = arith.mulf %4, %8 : vector<8x64xf32>
    %11 = arith.mulf %7, %9 : vector<8x64xf32>
    %12 = arith.subf %10, %11 : vector<8x64xf32>
    %13 = arith.truncf %12 : vector<8x64xf32> to vector<8x64xbf16>
    %14 = arith.mulf %4, %9 : vector<8x64xf32>
    %15 = arith.mulf %7, %8 : vector<8x64xf32>
    %16 = arith.addf %14, %15 : vector<8x64xf32>
    %17 = arith.truncf %16 : vector<8x64xf32> to vector<8x64xbf16>
    %c0_11 = arith.constant 0 : index
    %c0_12 = arith.constant 0 : index
    %c0_13 = arith.constant 0 : index
    %18 = vector.load %arg4[%c0_11, %c0_12, %c0_13] : memref<2x8x8xbf16, #tpu.memory_space<vmem>>, vector<1x8x8xbf16>
    %19 = vector.shape_cast %18 : vector<1x8x8xbf16> to vector<8x8xbf16>
    %cst_14 = arith.constant dense<0.000000e+00> : vector<8x64xf32>
    %20 = tpu.matmul %19, %13, %cst_14 {dimension_numbers = #tpu.dot_dimension_numbers<[1], [0], [0], [1], [0, 0, 1, 1], [], []>} : vector<8x8xbf16>, vector<8x64xbf16>, vector<8x64xf32> -> vector<8x64xf32>
    %c1_15 = arith.constant 1 : index
    %c0_16 = arith.constant 0 : index
    %c0_17 = arith.constant 0 : index
    %21 = vector.load %arg4[%c1_15, %c0_16, %c0_17] : memref<2x8x8xbf16, #tpu.memory_space<vmem>>, vector<1x8x8xbf16>
    %22 = vector.shape_cast %21 : vector<1x8x8xbf16> to vector<8x8xbf16>
    %cst_18 = arith.constant dense<0.000000e+00> : vector<8x64xf32>
    %23 = tpu.matmul %22, %17, %cst_18 {dimension_numbers = #tpu.dot_dimension_numbers<[1], [0], [0], [1], [0, 0, 1, 1], [], []>} : vector<8x8xbf16>, vector<8x64xbf16>, vector<8x64xf32> -> vector<8x64xf32>
    %24 = arith.addf %20, %23 : vector<8x64xf32>
    %c0_i32 = arith.constant 0 : i32
    %25 = arith.cmpi eq, %arg1, %c0_i32 : i32
    %26 = arith.extui %25 : i1 to i32
    %c0_i32_19 = arith.constant 0 : i32
    %27 = arith.cmpi ne, %26, %c0_i32_19 : i32
    scf.if %27 {
      %c0_24 = arith.constant 0 : index
      %c0_25 = arith.constant 0 : index
      %34 = vector.load %arg11[%c0_24, %c0_25] : memref<8x64xf32, #tpu.memory_space<vmem>>, vector<8x64xf32>
      tpu.vector_store %arg11[%c0_24, %c0_25], %24 {strides = array<i32>} : memref<8x64xf32, #tpu.memory_space<vmem>>, vector<8x64xf32>,
    } else {
    }
    %c0_i32_20 = arith.constant 0 : i32
    %28 = arith.cmpi sgt, %arg1, %c0_i32_20 : i32
    %29 = arith.extui %28 : i1 to i32
    %c0_i32_21 = arith.constant 0 : i32
    %30 = arith.cmpi ne, %29, %c0_i32_21 : i32
    scf.if %30 {
      %c0_24 = arith.constant 0 : index
      %c0_25 = arith.constant 0 : index
      %34 = vector.load %arg11[%c0_24, %c0_25] : memref<8x64xf32, #tpu.memory_space<vmem>>, vector<8x64xf32>
      %35 = arith.addf %34, %24 : vector<8x64xf32>
      %c0_26 = arith.constant 0 : index
      %c0_27 = arith.constant 0 : index
      %36 = vector.load %arg11[%c0_26, %c0_27] : memref<8x64xf32, #tpu.memory_space<vmem>>, vector<8x64xf32>
      tpu.vector_store %arg11[%c0_26, %c0_27], %35 {strides = array<i32>} : memref<8x64xf32, #tpu.memory_space<vmem>>, vector<8x64xf32>,
    } else {
    }
    %c0_i32_22 = arith.constant 0 : i32
    %31 = arith.cmpi eq, %arg1, %c0_i32_22 : i32
    %32 = arith.extui %31 : i1 to i32
    %c0_i32_23 = arith.constant 0 : i32
    %33 = arith.cmpi ne, %32, %c0_i32_23 : i32
    scf.if %33 {
      %c0_24 = arith.constant 0 : index
      %c0_25 = arith.constant 0 : index
      %34 = vector.load %arg11[%c0_24, %c0_25] : memref<8x64xf32, #tpu.memory_space<vmem>>, vector<8x64xf32>
      %35 = arith.addf %34, %0 : vector<8x64xf32>
      %c0_26 = arith.constant 0 : index
      %c0_27 = arith.constant 0 : index
      %36 = vector.load %arg7[%c0_26, %c0_27] : memref<64x64xf32, #tpu.memory_space<vmem>>, vector<64x64xf32>
      %cst_28 = arith.constant dense<0.000000e+00> : vector<8x64xf32>
      %37 = tpu.matmul %35, %36, %cst_28 {dimension_numbers = #tpu.dot_dimension_numbers<[1], [0], [0], [1], [0, 0, 1, 1], [], []>} : vector<8x64xf32>, vector<64x64xf32>, vector<8x64xf32> -> vector<8x64xf32>
      %cst_29 = arith.constant 3.125000e-02 : f32
      %38 = vector.broadcast %cst_29 : f32 to vector<8x64xf32>
      %39 = arith.mulf %37, %38 : vector<8x64xf32>
      %40 = arith.subf %35, %39 : vector<8x64xf32>
      %41 = arith.mulf %40, %40 : vector<8x64xf32>
      %cst_30 = arith.constant dense<0.000000e+00> : vector<8x64xf32>
      %42 = tpu.matmul %41, %36, %cst_30 {dimension_numbers = #tpu.dot_dimension_numbers<[1], [0], [0], [1], [0, 0, 1, 1], [], []>} : vector<8x64xf32>, vector<64x64xf32>, vector<8x64xf32> -> vector<8x64xf32>
      %cst_31 = arith.constant 3.125000e-02 : f32
      %43 = vector.broadcast %cst_31 : f32 to vector<8x64xf32>
      %44 = arith.mulf %42, %43 : vector<8x64xf32>
      %cst_32 = arith.constant 9.99999996E-13 : f32
      %45 = vector.broadcast %cst_32 : f32 to vector<8x64xf32>
      %46 = arith.addf %44, %45 : vector<8x64xf32>
      %47 = math.rsqrt %46 : vector<8x64xf32>
      %48 = arith.mulf %40, %47 : vector<8x64xf32>
      %c0_33 = arith.constant 0 : index
      %c0_34 = arith.constant 0 : index
      %49 = vector.load %arg8[%c0_33, %c0_34] : memref<1x64xf32, #tpu.memory_space<vmem>>, vector<1x64xf32>
      %50 = vector.broadcast %49 : vector<1x64xf32> to vector<8x64xf32>
      %51 = arith.mulf %50, %48 : vector<8x64xf32>
      %c0_35 = arith.constant 0 : index
      %c0_36 = arith.constant 0 : index
      %52 = vector.load %arg9[%c0_35, %c0_36] : memref<1x64xf32, #tpu.memory_space<vmem>>, vector<1x64xf32>
      %53 = vector.broadcast %52 : vector<1x64xf32> to vector<8x64xf32>
      %54 = arith.addf %51, %53 : vector<8x64xf32>
      %c0_37 = arith.constant 0 : index
      %c0_38 = arith.constant 0 : index
      %55 = vector.load %arg10[%c0_37, %c0_38] : memref<8x64xf32, #tpu.memory_space<vmem>>, vector<8x64xf32>
      tpu.vector_store %arg10[%c0_37, %c0_38], %54 {strides = array<i32>} : memref<8x64xf32, #tpu.memory_space<vmem>>, vector<8x64xf32>,
    } else {
    }
    return
  }
  func.func @transform_0(%arg0: i32, %arg1: i32) -> (i32, i32) {
    %c0_i32 = arith.constant 0 : i32
    %c0_i32_0 = arith.constant 0 : i32
    return %c0_i32, %arg0 : i32, i32
  }
  func.func @transform_1(%arg0: i32, %arg1: i32) -> (i32, i32, i32) {
    %c0_i32 = arith.constant 0 : i32
    %c0_i32_0 = arith.constant 0 : i32
    %c0_i32_1 = arith.constant 0 : i32
    return %c0_i32, %arg1, %c0_i32_0 : i32, i32, i32
  }
  func.func @transform_2(%arg0: i32, %arg1: i32) -> (i32, i32, i32) {
    %c0_i32 = arith.constant 0 : i32
    %c0_i32_0 = arith.constant 0 : i32
    %c0_i32_1 = arith.constant 0 : i32
    return %c0_i32, %c0_i32_0, %arg1 : i32, i32, i32
  }
  func.func @transform_3(%arg0: i32, %arg1: i32) -> (i32, i32) {
    %c0_i32 = arith.constant 0 : i32
    %c0_i32_0 = arith.constant 0 : i32
    return %arg1, %c0_i32 : i32, i32
  }
  func.func @transform_4(%arg0: i32, %arg1: i32) -> (i32, i32) {
    %c0_i32 = arith.constant 0 : i32
    %c0_i32_0 = arith.constant 0 : i32
    return %arg1, %c0_i32 : i32, i32
  }
  func.func @transform_5(%arg0: i32, %arg1: i32) -> (i32, i32) {
    %c0_i32 = arith.constant 0 : i32
    %c0_i32_0 = arith.constant 0 : i32
    %c0_i32_1 = arith.constant 0 : i32
    return %c0_i32, %c0_i32_0 : i32, i32
  }
  func.func @transform_6(%arg0: i32, %arg1: i32) -> (i32, i32) {
    %c0_i32 = arith.constant 0 : i32
    %c0_i32_0 = arith.constant 0 : i32
    %c0_i32_1 = arith.constant 0 : i32
    return %c0_i32, %c0_i32_0 : i32, i32
  }
  func.func @transform_7(%arg0: i32, %arg1: i32) -> (i32, i32) {
    %c0_i32 = arith.constant 0 : i32
    %c0_i32_0 = arith.constant 0 : i32
    %c0_i32_1 = arith.constant 0 : i32
    return %c0_i32, %c0_i32_0 : i32, i32
  }
  func.func @transform_8(%arg0: i32, %arg1: i32) -> (i32, i32) {
    %c0_i32 = arith.constant 0 : i32
    %c0_i32_0 = arith.constant 0 : i32
    return %c0_i32, %arg0 : i32, i32
  }
}

</mosaic_0001>

<llo_original>
// kernel: _lambda_.1
$region0: #{_lambda_.1}
  #allocation0 [shape = 'u32[]', space=smem, size = 0x4, offset = 0x4, fixed_abs, tag = 'smem constant byte address 0x4 - core index']
  #allocation1 [shape = 'u32[72,128]{1,0:T(1,128)}', space=vmem, size = 0x9000, scoped, tag = 'internal scratch']
  #allocation2 [shape = 'f32[8,64]{1,0:T(8,128)}', space=vmem, size = 0x1000, scoped, tag = 'scratch operand']
  %s0 = inlined_call_operand.vmem [shape: f32[8,64], index: 0, kind: input, shape index: {}]
  %s1 = inlined_call_operand.vmem [shape: bf16[2,8,8], index: 1, kind: input, shape index: {}]
  %s2 = inlined_call_operand.vmem [shape: bf16[2,8,8], index: 2, kind: input, shape index: {}]
  %s3 = inlined_call_operand.vmem [shape: f32[8,64], index: 3, kind: input, shape index: {}]
  %s4 = inlined_call_operand.vmem [shape: f32[8,64], index: 4, kind: input, shape index: {}]
  %s5 = inlined_call_operand.hbm [shape: f32[64,64], index: 5, kind: input, shape index: {}]
  %s6 = inlined_call_operand.vmem [shape: f32[1,64], index: 6, kind: input, shape index: {}]
  %s7 = inlined_call_operand.vmem [shape: f32[1,64], index: 7, kind: input, shape index: {}]
  %s8 = inlined_call_operand.vmem [shape: f32[8,64], index: 8, kind: output, shape index: {}]
  %s9 = sld [smem:[#allocation0]]
  $region58: #{_lambda_.1} parent=0
    _
  %s11 = ssub.s32 1, %s9
  %s12 = scalar_select 0, %s11, %s9
  $region1: #{_lambda_.1} parent=0
    #allocation3 [shape = 'u8[32768]{0}', space=vmem, size = 0x8000, scoped, tag = 'input window, operand 5, single buffered']
    #allocation4 [shape = 's32[1]{0}', space=sflag, size = 0x4, scoped, tag = 'scoped memory for _lambda_.1']
    %13 = vsyncpa [#allocation4], 0
    // Predicated region
    $region2: #{_lambda_.1} parent=1 // pred_check
      _
    $region3: #{_lambda_.1} parent=1 // pred_check_branch
      %15 = sbr.rel (0) target = $region5
    $region4: #{_lambda_.1} parent=1 // pred_region
      _
    $region5: #{_lambda_.1} parent=1 // pred_fallthru
      _
    // Predicated region
    $region6: #{_lambda_.1} parent=1 // pred_check
      _
    $region7: #{_lambda_.1} parent=1 // pred_check_branch
      %17 = sbr.rel (0) target = $region9
    $region8: #{_lambda_.1} parent=1 // pred_region
      _
    $region9: #{_lambda_.1} parent=1 // pred_fallthru
      _
    // Predicated region
    $region10: #{_lambda_.1} parent=1 // pred_check
      _
    $region11: #{_lambda_.1} parent=1 // pred_check_branch
      %19 = sbr.rel (0) target = $region13
    $region12: #{_lambda_.1} parent=1 // pred_region
      _
    $region13: #{_lambda_.1} parent=1 // pred_fallthru
      _
    // Predicated region
    $region14: #{_lambda_.1} parent=1 // pred_check
      _
    $region15: #{_lambda_.1} parent=1 // pred_check_branch
      %21 = sbr.rel (0) target = $region17
    $region16: #{_lambda_.1} parent=1 // pred_region
      _
    $region17: #{_lambda_.1} parent=1 // pred_fallthru
      _
    // Predicated region
    $region18: #{_lambda_.1} parent=1 // pred_check
      _
    $region19: #{_lambda_.1} parent=1 // pred_check_branch
      %23 = sbr.rel (0) target = $region21
    $region20: #{_lambda_.1} parent=1 // pred_region
      _
    $region21: #{_lambda_.1} parent=1 // pred_fallthru
      _
    // Predicated region
    $region22: #{_lambda_.1} parent=1 // pred_check
      _
    $region23: #{_lambda_.1} parent=1 // pred_check_branch
      %25 = sbr.rel (0) target = $region25
    $region24: #{_lambda_.1} parent=1 // pred_region
      %27 = vsyncadd [#allocation4], 0
      %s28 = sshll.u32 %s5, 4
      %s29 = int_to_ptr.hbm [resolvable:$true] %s28
      %s30 = sshll.u32 [#allocation3], 4
      %s31 = int_to_ptr.vmem [resolvable:$true] %s30
      %36 = dma.hbm_to_vmem [thread:$0]  %s29, 1024, %s31, [#allocation4], 128, 128, 8
    $region25: #{_lambda_.1} parent=1 // pred_fallthru
      _
    // Predicated region
    $region26: #{_lambda_.1} parent=1 // pred_check
      _
    $region27: #{_lambda_.1} parent=1 // pred_check_branch
      %38 = sbr.rel (0) target = $region29
    $region28: #{_lambda_.1} parent=1 // pred_region
      _
    $region29: #{_lambda_.1} parent=1 // pred_fallthru
      _
    // Predicated region
    $region30: #{_lambda_.1} parent=1 // pred_check
      _
    $region31: #{_lambda_.1} parent=1 // pred_check_branch
      %40 = sbr.rel (0) target = $region33
    $region32: #{_lambda_.1} parent=1 // pred_region
      _
    $region33: #{_lambda_.1} parent=1 // pred_fallthru
      _
    // Predicated region
    $region34: #{_lambda_.1} parent=1 // pred_check
      _
    $region35: #{_lambda_.1} parent=1 // pred_check_branch
      %42 = sbr.rel (0) target = $region37
    $region36: #{_lambda_.1} parent=1 // pred_region
      %44 = dma.done [#allocation4], 1024
    $region37: #{_lambda_.1} parent=1 // pred_fallthru
      _
    %v46 = vld [vmem:[%s0] sm:$0xff]
    %v47 = vpack.c.bf16 %v46, %v46
    %v48 = vld [vmem:[%s1] sm:$0xf]
    %vm49 = vcmask 64512
    %v51 = vsel %vm49, %v48, 0
    %vm53 = vcmask 1043456
    %v55 = vsel %vm53, %v47, 0
    %57 = vmatpush.bf16.msra.mxu0 0
    %58 = vmatpush.bf16.msra.mxu0 0
    %59 = vmatpush.bf16.msra.mxu0 0
    %60 = vmatpush.bf16.msra.mxu0 0
    %61 = vmatpush.bf16.msra.mxu0 0
    %62 = vmatpush.bf16.msra.mxu0 0
    %63 = vmatpush.bf16.msra.mxu0 0
    %64 = vmatpush.bf16.msra.mxu0 %v55
    %65 = vmatmul.bf16.gmra.mxu0 %v51
    %v66 = vpop.f32.mrf.mxu0
    %v67 = vadd.f32 0.0, %v66
    %v68 = vpop.f32.mrf.mxu0
    %69 = vdwg.mxu0
    %s70 = scalar_lea.vmem %s1, 4
    %v71 = vld [vmem:[%s70] sm:$0xf]
    %v73 = vsel %vm49, %v71, 0
    %75 = vmatpush.bf16.msra.mxu0 0
    %76 = vmatpush.bf16.msra.mxu0 0
    %77 = vmatpush.bf16.msra.mxu0 0
    %78 = vmatpush.bf16.msra.mxu0 0
    %79 = vmatpush.bf16.msra.mxu0 0
    %80 = vmatpush.bf16.msra.mxu0 0
    %81 = vmatpush.bf16.msra.mxu0 0
    %82 = vmatpush.bf16.msra.mxu0 %v55
    %83 = vmatmul.bf16.gmra.mxu0 %v73
    %v84 = vpop.f32.mrf.mxu0
    %v85 = vadd.f32 0.0, %v84
    %v86 = vpop.f32.mrf.mxu0
    %87 = vdwg.mxu0
    %v88 = vld [vmem:[%s3] sm:$0xff]
    %v89 = vld [vmem:[%s4] sm:$0xff]
    %v90 = vmul.f32 %v67, %v88
    %v91 = vmul.f32 %v85, %v89
    %v92 = vsub.f32 %v90, %v91
    %v93 = vpack.c.bf16 %v92, %v92
    %v94 = vmul.f32 %v67, %v89
    %v95 = vmul.f32 %v85, %v88
    %v96 = vadd.f32 %v94, %v95
    %v97 = vpack.c.bf16 %v96, %v96
    %v98 = vld [vmem:[%s2] sm:$0xf]
    %s99 = scalar_lea.vmem %s2, 4
    %v100 = vld [vmem:[%s99] sm:$0xf]
    %v102 = vsel %vm49, %v100, 0
    %v105 = vsel %vm53, %v97, 0
    %107 = vmatpush.bf16.msra.mxu0 0
    %108 = vmatpush.bf16.msra.mxu0 0
    %109 = vmatpush.bf16.msra.mxu0 0
    %110 = vmatpush.bf16.msra.mxu0 0
    %111 = vmatpush.bf16.msra.mxu0 0
    %112 = vmatpush.bf16.msra.mxu0 0
    %113 = vmatpush.bf16.msra.mxu0 0
    %114 = vmatpush.bf16.msra.mxu0 %v105
    %115 = vmatmul.bf16.gmra.mxu0 %v102
    %v116 = vpop.f32.mrf.mxu0
    %v117 = vadd.f32 0.0, %v116
    %v118 = vpop.f32.mrf.mxu0
    %119 = vdwg.mxu0
    %v121 = vsel %vm49, %v98, 0
    %v124 = vsel %vm53, %v93, 0
    %126 = vmatpush.bf16.msra.mxu0 0
    %127 = vmatpush.bf16.msra.mxu0 0
    %128 = vmatpush.bf16.msra.mxu0 0
    %129 = vmatpush.bf16.msra.mxu0 0
    %130 = vmatpush.bf16.msra.mxu0 0
    %131 = vmatpush.bf16.msra.mxu0 0
    %132 = vmatpush.bf16.msra.mxu0 0
    %133 = vmatpush.bf16.msra.mxu0 %v124
    %134 = vmatmul.bf16.gmra.mxu0 %v121
    %v135 = vpop.f32.mrf.mxu0
    %v136 = vadd.f32 %v117, %v135
    %v137 = vpop.f32.mrf.mxu0
    %138 = vdwg.mxu0
    %p139 = scmp.eq.s32.totalorder 0, 0
    // Predicated region
    $region38: #{_lambda_.1} parent=1 // pred_check
      %p140 = pneg %p139
    $region39: #{_lambda_.1} parent=1 // pred_check_branch
      %142 = sbr.rel (%p140) target = $region41
    $region40: #{_lambda_.1} parent=1 // pred_region
      %vm143 = vcmask 523264
      %144 = vst.msk [vmem:[#allocation2] sm:$0xff] %vm143, %v136
    $region41: #{_lambda_.1} parent=1 // pred_fallthru
      _
    %p145 = scmp.gt.s32.totalorder 0, 0
    // Predicated region
    $region42: #{_lambda_.1} parent=1 // pred_check
      %p146 = pneg %p145
    $region43: #{_lambda_.1} parent=1 // pred_check_branch
      %148 = sbr.rel (%p146) target = $region45
    $region44: #{_lambda_.1} parent=1 // pred_region
      %v149 = vld [vmem:[#allocation2] sm:$0xff]
      %v150 = vadd.f32 %v149, %v136
      %vm151 = vcmask 523264
      %152 = vst.msk [vmem:[#allocation2] sm:$0xff] %vm151, %v150
    $region45: #{_lambda_.1} parent=1 // pred_fallthru
      _
    // Predicated region
    $region46: #{_lambda_.1} parent=1 // pred_check
      %p153 = pneg %p139
    $region47: #{_lambda_.1} parent=1 // pred_check_branch
      %155 = sbr.rel (%p153) target = $region49
    $region48: #{_lambda_.1} parent=1 // pred_region
      %v156 = vld [vmem:[#allocation2] sm:$0xff]
      %v157 = vadd.f32 %v156, %v46
      %v158 = vld [vmem:[#allocation3] sm:$0xff]
      %v159 = vld [vmem:[#allocation3 + $0x8] sm:$0xff]
      %v160 = vld [vmem:[#allocation3 + $0x10] sm:$0xff]
      %v161 = vld [vmem:[#allocation3 + $0x18] sm:$0xff]
      %v162 = vld [vmem:[#allocation3 + $0x20] sm:$0xff]
      %v163 = vld [vmem:[#allocation3 + $0x28] sm:$0xff]
      %v164 = vld [vmem:[#allocation3 + $0x30] sm:$0xff]
      %v165 = vld [vmem:[#allocation3 + $0x38] sm:$0xff]
      %vm166 = vcmask 523264
      %v168 = vsel %vm166, %v157, 0
      %170 = vmatpush.msra.mxu0 0.0
      %171 = vmatpush.msra.mxu0 0.0
      %172 = vmatpush.msra.mxu0 0.0
      %173 = vmatpush.msra.mxu0 0.0
      %174 = vmatpush.msra.mxu0 0.0
      %175 = vmatpush.msra.mxu0 0.0
      %176 = vmatpush.msra.mxu0 0.0
      %177 = vmatpush.msra.mxu0 0.0
      %178 = vmatpush.msra.mxu0 %v165
      %179 = vmatpush.msra.mxu0 %v164
      %180 = vmatpush.msra.mxu0 %v163
      %181 = vmatpush.msra.mxu0 %v162
      %182 = vmatpush.msra.mxu0 %v161
      %183 = vmatpush.msra.mxu0 %v160
      %184 = vmatpush.msra.mxu0 %v159
      %185 = vmatpush.msra.mxu0 %v158
      %186 = vmatmul.f32.gmra.mxu0 %v168
      %v187 = vpop.f32.mrf.mxu0
      %v188 = vadd.f32 0.0, %v187
      %189 = vdwg.mxu0
      %v190 = vmul.f32 %v188, 0.03125
      %v191 = vsub.f32 %v157, %v190
      %v192 = vmul.f32 %v191, %v191
      %v194 = vsel %vm166, %v192, 0
      %196 = vmatpush.msra.mxu0 0.0
      %197 = vmatpush.msra.mxu0 0.0
      %198 = vmatpush.msra.mxu0 0.0
      %199 = vmatpush.msra.mxu0 0.0
      %200 = vmatpush.msra.mxu0 0.0
      %201 = vmatpush.msra.mxu0 0.0
      %202 = vmatpush.msra.mxu0 0.0
      %203 = vmatpush.msra.mxu0 0.0
      %204 = vmatpush.msra.mxu0 %v165
      %205 = vmatpush.msra.mxu0 %v164
      %206 = vmatpush.msra.mxu0 %v163
      %207 = vmatpush.msra.mxu0 %v162
      %208 = vmatpush.msra.mxu0 %v161
      %209 = vmatpush.msra.mxu0 %v160
      %210 = vmatpush.msra.mxu0 %v159
      %211 = vmatpush.msra.mxu0 %v158
      %212 = vmatmul.f32.gmra.mxu0 %v194
      %v213 = vpop.f32.mrf.mxu0
      %v214 = vadd.f32 0.0, %v213
      %215 = vdwg.mxu0
      %v216 = vmul.f32 %v214, 0.03125
      %v217 = vadd.f32 %v216, 1e-12
      %v218 = vrsqrt.pop %v217
      %v219 = vmul.f32 %v218, %v217
      %v220 = vmul.f32 %v219, %v218
      %v221 = vmul.f32 0.5, %v220
      %v222 = vsub.f32 1.5, %v221
      %v223 = vmul.f32 %v218, %v222
      %vm224 = vweird.f32 %v217
      %vm225 = vweird.f32 %v218
      %vm226 = vmor %vm224, %vm225
      %v227 = vsel %vm226, %v218, %v223
      %v228 = vmul.f32 %v191, %v227
      %v229 = vld [vmem:[%s6] sm:$0x1]
      %v231 = vperm.slane %v229, 0
      %v233 = vmul.f32 %v231, %v228
      %v234 = vld [vmem:[%s7] sm:$0x1]
      %v236 = vperm.slane %v234, 0
      %v238 = vadd.f32 %v233, %v236
      %239 = vst.msk [vmem:[%s8] sm:$0xff] %vm166, %v238
    $region49: #{_lambda_.1} parent=1 // pred_fallthru
      _
    // Predicated region
    $region50: #{_lambda_.1} parent=1 // pred_check
      _
    $region51: #{_lambda_.1} parent=1 // pred_check_branch
      %241 = sbr.rel (0) target = $region53
    $region52: #{_lambda_.1} parent=1 // pred_region
      _
    $region53: #{_lambda_.1} parent=1 // pred_fallthru
      _
    // Predicated region
    $region54: #{_lambda_.1} parent=1 // pred_check
      _
    $region55: #{_lambda_.1} parent=1 // pred_check_branch
      %243 = sbr.rel (0) target = $region57
    $region56: #{_lambda_.1} parent=1 // pred_region
      _
    $region57: #{_lambda_.1} parent=1 // pred_fallthru
      _
    %244 = vsyncpa [#allocation4], 1

</llo_original>
